<compile_context>
chip_gen: v6e
topology: v6e:2x2x1
jax: 0.10.0
libtpu: 0.0.40
codegen_flags: <defaults>
</compile_context>

<pallas_src>
import functools

import jax
import jax.numpy as jnp
from jax.experimental import pallas as pl
from jax.experimental.pallas import tpu as pltpu

LANE = 128


def _round_up(x, m):
    return (x + m - 1) // m * m


def _sigmoid(x):
    # sigmoid(x) == 0.5*(tanh(0.5*x)+1): keeps the transcendental on the EUP.
    return 0.5 * (jnp.tanh(0.5 * x) + 1.0)


# ----------------------------------------------------------------------------
# Kernel
# ----------------------------------------------------------------------------
def _rnn_kernel(obs_ref, hin_ref,
                w1_ref, b1_ref,
                wg_ref, bg_ref,
                w2a_ref, b2a_ref, w2b_ref, b2b_ref,
                q_ref, hout_ref,
                gx_ref, hstack_ref,
                *, t_real):
    """One (batch_tile, time_chunk) grid point.

    Recurrent-carry invariant: hout's BlockSpec ignores the time-chunk axis,
    and that axis is the innermost, "arbitrary" grid axis, so hout_ref stays
    resident in VMEM and doubles as the GRU state carry.  Do NOT reorder the
    grid axes or mark the time axis "parallel".
    """
    c = pl.program_id(1)
    Tc, TB, Din = obs_ref.shape
    Hp = hout_ref.shape[-1]
    Ap = q_ref.shape[-1]

    @pl.when(c == 0)
    def _():
        hout_ref[...] = hin_ref[...]

    # ---- off-recurrence work, batched over the whole chunk (M = Tc*TB) ----
    # fc1 + ReLU, then the x-side GRU matmul (+ fused bias) into VMEM scratch.
    obs = obs_ref[...].reshape(Tc * TB, Din).astype(jnp.bfloat16)
    x = jnp.dot(obs, w1_ref[...], preferred_element_type=jnp.float32)
    x = jnp.maximum(x + b1_ref[...], 0.0)                      # padded lanes stay 0
    gx = jnp.dot(x.astype(jnp.bfloat16), wg_ref[0:Hp, :],
                 preferred_element_type=jnp.float32)
    gx_ref[...] = gx + bg_ref[...]                              # (Tc*TB, 4*Hp)

    # ---- serial recurrence: only the h-side matmul + gate math per step ----
    def step(j, h):
        row = pl.multiple_of(j * TB, TB)
        g = gx_ref[pl.ds(row, TB), :]
        g = g + jnp.dot(h.astype(jnp.bfloat16), wg_ref[Hp:2 * Hp, :],
                        preferred_element_type=jnp.float32)
        r = _sigmoid(g[:, 0:Hp])
        z = _sigmoid(g[:, Hp:2 * Hp])
        n = jnp.tanh(g[:, 2 * Hp:3 * Hp] + r * g[:, 3 * Hp:4 * Hp])
        h_new = (1.0 - z) * n + z * h
        if t_real % Tc != 0:
            # trailing padded timesteps must not advance the carry
            h_new = jnp.where(c * Tc + j < t_real, h_new, h)
        hstack_ref[pl.ds(row, TB), :] = h_new
        return h_new

    hout_ref[...] = jax.lax.fori_loop(0, Tc, step, hout_ref[...], unroll=True)

    # ---- fc2 head once per chunk (q is off the recurrent path) -------------
    hs = hstack_ref[...].astype(jnp.bfloat16)                   # (Tc*TB, Hp)
    y = jnp.dot(hs, w2a_ref[...], preferred_element_type=jnp.float32)
    y = jnp.maximum(y + b2a_ref[...], 0.0)
    q = jnp.dot(y.astype(jnp.bfloat16), w2b_ref[...],
                preferred_element_type=jnp.float32) + b2b_ref[...]
    q_ref[...] = q.reshape(Tc, TB, Ap).astype(q_ref.dtype)


# ----------------------------------------------------------------------------
# Host-side parameter packing (padding + GRU weight fusion, bf16 MXU operands)
# ----------------------------------------------------------------------------
def init_params(key, input_shape, rnn_hidden_dim, n_actions):
    """'Natural' parameters, (in, out) layout (transpose of PyTorch)."""
    ks = jax.random.split(key, 10)
    s = 0.1
    H = rnn_hidden_dim
    return {
        "w1":  s * jax.random.normal(ks[0], (input_shape, H), jnp.float32),
        "b1":  s * jax.random.normal(ks[1], (1, H), jnp.float32),
        # GRUCell weights, (in, 3*hidden), gate order [r, z, n]
        "w_ih": s * jax.random.normal(ks[2], (H, 3 * H), jnp.float32),
        "b_ih": s * jax.random.normal(ks[3], (1, 3 * H), jnp.float32),
        "w_hh": s * jax.random.normal(ks[4], (H, 3 * H), jnp.float32),
        "b_hh": s * jax.random.normal(ks[5], (1, 3 * H), jnp.float32),
        "w2a": s * jax.random.normal(ks[6], (H, H), jnp.float32),
        "b2a": s * jax.random.normal(ks[7], (1, H), jnp.float32),
        "w2b": s * jax.random.normal(ks[8], (H, n_actions), jnp.float32),
        "b2b": s * jax.random.normal(ks[9], (1, n_actions), jnp.float32),
    }


def pack_params(p, input_shape, rnn_hidden_dim, n_actions):
    """Pad every feature dim to 128 lanes, fuse GRU weights, store weights bf16."""
    H = rnn_hidden_dim
    Hp = _round_up(H, LANE)
    Ap = _round_up(n_actions, LANE)
    bf = jnp.bfloat16

    def pad2(a, rows, cols, dtype=jnp.float32):
        out = jnp.zeros((rows, cols), jnp.float32)
        out = out.at[:a.shape[0], :a.shape[1]].set(a)
        return out.astype(dtype)

    w1 = pad2(p["w1"], input_shape, Hp, bf)
    b1 = pad2(p["b1"], 1, Hp)

    # Fused GRU weight (2*Hp, 4*Hp); output slabs: [r | z | n_input | n_hidden]
    # rows 0:Hp   -> x contribution, rows Hp:2*Hp -> h contribution.
    wg = jnp.zeros((2 * Hp, 4 * Hp), jnp.float32)
    wg = wg.at[:H, 0:H].set(p["w_ih"][:, 0:H])                       # r, x rows
    wg = wg.at[Hp:Hp + H, 0:H].set(p["w_hh"][:, 0:H])                # r, h rows
    wg = wg.at[:H, Hp:Hp + H].set(p["w_ih"][:, H:2 * H])             # z, x rows
    wg = wg.at[Hp:Hp + H, Hp:Hp + H].set(p["w_hh"][:, H:2 * H])      # z, h rows
    wg = wg.at[:H, 2 * Hp:2 * Hp + H].set(p["w_ih"][:, 2 * H:])      # n_i, x rows
    wg = wg.at[Hp:Hp + H, 3 * Hp:3 * Hp + H].set(p["w_hh"][:, 2 * H:])  # n_h
    wg = wg.astype(bf)

    bg = jnp.zeros((1, 4 * Hp), jnp.float32)
    bg = bg.at[:, 0:H].set(p["b_ih"][:, 0:H] + p["b_hh"][:, 0:H])
    bg = bg.at[:, Hp:Hp + H].set(p["b_ih"][:, H:2 * H] + p["b_hh"][:, H:2 * H])
    bg = bg.at[:, 2 * Hp:2 * Hp + H].set(p["b_ih"][:, 2 * H:])
    bg = bg.at[:, 3 * Hp:3 * Hp + H].set(p["b_hh"][:, 2 * H:])

    return {
        "w1": w1, "b1": b1, "wg": wg, "bg": bg,
        "w2a": pad2(p["w2a"], Hp, Hp, bf), "b2a": pad2(p["b2a"], 1, Hp),
        "w2b": pad2(p["w2b"], Hp, Ap, bf), "b2b": pad2(p["b2b"], 1, Ap),
    }


# ----------------------------------------------------------------------------
# Wrappers
# ----------------------------------------------------------------------------
def rnn_forward_seq(obs_seq, hidden_state, packed, *, rnn_hidden_dim,
                    n_actions, tile_b=256, time_chunk=8):
    """Apply the module forward to a whole (T, B, input_shape) sequence.

    Returns (q_seq (T, B, n_actions) f32, h_final (B, rnn_hidden_dim) f32).
    Per-timestep semantics are exactly the PyTorch module's forward (with
    bf16 MXU operands / f32 accumulation).
    """
    T, B, Din = obs_seq.shape
    h_in = hidden_state.reshape(-1, rnn_hidden_dim)
    assert h_in.shape[0] == B, "flattened hidden batch must match obs batch"

    Hp = packed["w2a"].shape[0]
    Ap = packed["w2b"].shape[1]

    # Batch tiling: prefer >=2 tiles of >=128 rows (feeds the MXU and lets the
    # "parallel" batch axis occupy both TensorCores on v7x); small batches fall
    # back to a single tile rounded up to 8 sublanes.
    B8 = _round_up(B, 8)
    if B8 >= 2 * LANE:
        TILE_B = max(LANE, min(tile_b, _round_up((B8 + 1) // 2, 8)))
    else:
        TILE_B = min(tile_b, B8)
    B_pad = _round_up(B, TILE_B)
    nb = B_pad // TILE_B

    # Time chunking: Tc recurrence steps per grid step amortize per-grid-step
    # overhead and let fc1 / the x-side GRU dot / fc2 run chunk-batched.
    Tc = max(1, min(time_chunk, T))
    n_chunks = pl.cdiv(T, Tc)
    T_pad = n_chunks * Tc

    obs_p = jnp.zeros((T_pad, B_pad, Din), jnp.float32)
    obs_p = obs_p.at[:T, :B, :].set(obs_seq.astype(jnp.float32))
    h_p = jnp.zeros((B_pad, Hp), jnp.float32).at[:B, :rnn_hidden_dim].set(h_in)

    def wspec(arr):
        # constant index_map -> DMA'd once, resident in VMEM for the whole run
        return pl.BlockSpec(arr.shape, lambda b, c: (0, 0))

    in_specs = [
        pl.BlockSpec((Tc, TILE_B, Din), lambda b, c: (c, b, 0)),   # obs chunk
        pl.BlockSpec((TILE_B, Hp), lambda b, c: (b, 0)),           # h_in
        wspec(packed["w1"]), wspec(packed["b1"]),
        wspec(packed["wg"]), wspec(packed["bg"]),
        wspec(packed["w2a"]), wspec(packed["b2a"]),
        wspec(packed["w2b"]), wspec(packed["b2b"]),
    ]
    out_specs = (
        pl.BlockSpec((Tc, TILE_B, Ap), lambda b, c: (c, b, 0)),    # q (bf16, lane-dense)
        pl.BlockSpec((TILE_B, Hp), lambda b, c: (b, 0)),           # h carry / out
    )
    out_shape = (
        jax.ShapeDtypeStruct((T_pad, B_pad, Ap), jnp.bfloat16),
        jax.ShapeDtypeStruct((B_pad, Hp), jnp.float32),
    )
    scratch_shapes = [
        pltpu.VMEM((Tc * TILE_B, 4 * Hp), jnp.float32),   # gx (+bias) stack
        pltpu.VMEM((Tc * TILE_B, Hp), jnp.float32),       # h_new stack for fc2
    ]

    weight_bytes = sum(int(packed[k].size) * packed[k].dtype.itemsize
                       for k in ("w1", "b1", "wg", "bg",
                                 "w2a", "b2a", "w2b", "b2b"))
    bytes_accessed = (weight_bytes + 4 * obs_p.size
                      + 2 * T_pad * B_pad * Ap + 2 * 4 * h_p.size)
    flops = 2 * T_pad * B_pad * (Din * Hp + 2 * Hp * 4 * Hp + Hp * Hp + Hp * Ap)

    kernel = functools.partial(_rnn_kernel, t_real=T)

    q_pad, h_pad_out = pl.pallas_call(
        kernel,
        grid=(nb, n_chunks),
        in_specs=in_specs,
        out_specs=out_specs,
        out_shape=out_shape,
        scratch_shapes=scratch_shapes,
        input_output_aliases={1: 1},   # reuse the padded h_in HBM buffer
        compiler_params=pltpu.CompilerParams(
            dimension_semantics=("parallel", "arbitrary"),
            vmem_limit_bytes=32 * 1024 * 1024,
        ),
        cost_estimate=pl.CostEstimate(
            flops=flops,
            transcendentals=3 * T_pad * B_pad * Hp,
            bytes_accessed=bytes_accessed,
        ),
    )(obs_p, h_p,
      packed["w1"], packed["b1"], packed["wg"], packed["bg"],
      packed["w2a"], packed["b2a"], packed["w2b"], packed["b2b"])

    q = q_pad[:T, :B, :n_actions].astype(jnp.float32)
    h = h_pad_out[:B, :rnn_hidden_dim]
    return q, h


def rnn_forward(obs, hidden_state, packed, *, rnn_hidden_dim, n_actions):
    """Single-step forward, exactly matching the PyTorch module's forward."""
    q_seq, h = rnn_forward_seq(obs[None], hidden_state, packed,
                               rnn_hidden_dim=rnn_hidden_dim,
                               n_actions=n_actions)
    return q_seq[0], h


# ----------------------------------------------------------------------------
# Pure-JAX reference (same bf16-operand / f32-accumulate matmul numerics)
# ----------------------------------------------------------------------------
def _bdot(a, b):
    return jnp.dot(a.astype(jnp.bfloat16), b.astype(jnp.bfloat16),
                   preferred_element_type=jnp.float32)


def _reference(obs, hidden_state, params, H):
    h = hidden_state.reshape(-1, H)
    x = jnp.maximum(_bdot(obs, params["w1"]) + params["b1"], 0.0)
    gi = _bdot(x, params["w_ih"]) + params["b_ih"]
    gh = _bdot(h, params["w_hh"]) + params["b_hh"]
    r = _sigmoid(gi[:, :H] + gh[:, :H])
    z = _sigmoid(gi[:, H:2 * H] + gh[:, H:2 * H])
    n = jnp.tanh(gi[:, 2 * H:] + r * gh[:, 2 * H:])
    h_new = (1.0 - z) * n + z * h
    y = jnp.maximum(_bdot(h_new, params["w2a"]) + params["b2a"], 0.0)
    q = _bdot(y, params["w2b"]) + params["b2b"]
    return q, h_new


def _reference_seq(obs_seq, hidden_state, params, H):
    def step(h, obs):
        q, h_new = _reference(obs, h, params, H)
        return h_new, q
    h_final, q_seq = jax.lax.scan(step, hidden_state.reshape(-1, H), obs_seq)
    return q_seq, h_final


# ----------------------------------------------------------------------------
if __name__ == "__main__":
    B = 8                # batch (n_agents * episodes flattened)
    INPUT_SHAPE = 48     # obs feature dim (args.conv == False path)
    HIDDEN = 64          # args.rnn_hidden_dim
    N_ACTIONS = 8        # args.n_actions
    T = 8                # timesteps carried inside the kernel

    key = jax.random.PRNGKey(0)
    k_obs, k_h, k_p = jax.random.split(key, 3)
    obs_seq = jax.random.normal(k_obs, (T, B, INPUT_SHAPE), jnp.float32)
    hidden_state = jax.random.normal(k_h, (B, HIDDEN), jnp.float32)
    params = init_params(k_p, INPUT_SHAPE, HIDDEN, N_ACTIONS)
    packed = pack_params(params, INPUT_SHAPE, HIDDEN, N_ACTIONS)

    ATOL = RTOL = 3e-2   # bf16 MXU operands + bf16 q writeback => bf16-level agreement

    # 1) single-step forward (== module.forward semantics)
    q1, h1 = rnn_forward(obs_seq[0], hidden_state, packed,
                         rnn_hidden_dim=HIDDEN, n_actions=N_ACTIONS)
    jax.block_until_ready((q1, h1))
    q1_ref, h1_ref = _reference(obs_seq[0], hidden_state, params, HIDDEN)
    assert q1.shape == (B, N_ACTIONS) and h1.shape == (B, HIDDEN)
    assert jnp.allclose(q1, q1_ref, atol=ATOL, rtol=RTOL)
    assert jnp.allclose(h1, h1_ref, atol=ATOL, rtol=RTOL)

    # 2) whole sequence, one kernel launch, T % Tc == 0 path
    q_seq, h_T = rnn_forward_seq(obs_seq, hidden_state, packed,
                                 rnn_hidden_dim=HIDDEN, n_actions=N_ACTIONS)
    jax.block_until_ready((q_seq, h_T))
    q_seq_ref, h_T_ref = _reference_seq(obs_seq, hidden_state, params, HIDDEN)
    assert q_seq.shape == (T, B, N_ACTIONS) and h_T.shape == (B, HIDDEN)
    assert jnp.allclose(q_seq, q_seq_ref, atol=ATOL, rtol=RTOL)
    assert jnp.allclose(h_T, h_T_ref, atol=ATOL, rtol=RTOL)

    # 3) uneven time chunk (exercises the padded-timestep carry mask)
    q_seq3, h_T3 = rnn_forward_seq(obs_seq, hidden_state, packed,
                                   rnn_hidden_dim=HIDDEN, n_actions=N_ACTIONS,
                                   time_chunk=3)
    jax.block_until_ready((q_seq3, h_T3))
    assert jnp.allclose(q_seq3, q_seq_ref, atol=ATOL, rtol=RTOL)
    assert jnp.allclose(h_T3, h_T_ref, atol=ATOL, rtol=RTOL)

    print("KERNEL_OK")
</pallas_src>

<mosaic_0001>
module attributes {stable_mosaic.version = 11 : i64} {
  func.func @_rnn_kernel(%arg0: i32, %arg1: i32, %arg2: memref<1x8x48xf32, #tpu.memory_space<vmem>>, %arg3: memref<8x128xf32, #tpu.memory_space<vmem>>, %arg4: memref<48x128xbf16, #tpu.memory_space<vmem>>, %arg5: memref<1x128xf32, #tpu.memory_space<vmem>>, %arg6: memref<256x512xbf16, #tpu.memory_space<vmem>>, %arg7: memref<1x512xf32, #tpu.memory_space<vmem>>, %arg8: memref<128x128xbf16, #tpu.memory_space<vmem>>, %arg9: memref<1x128xf32, #tpu.memory_space<vmem>>, %arg10: memref<128x128xbf16, #tpu.memory_space<vmem>>, %arg11: memref<1x128xf32, #tpu.memory_space<vmem>>, %arg12: memref<1x8x128xbf16, #tpu.memory_space<vmem>>, %arg13: memref<8x128xf32, #tpu.memory_space<vmem>>, %arg14: memref<8x512xf32, #tpu.memory_space<vmem>>, %arg15: memref<8x128xf32, #tpu.memory_space<vmem>>) attributes {dimension_semantics = [#tpu.dimension_semantics<parallel>, #tpu.dimension_semantics<arbitrary>], iteration_bounds = array<i64: 1, 1>, scalar_prefetch = 0 : i64, scratch_operands = 2 : i64, tpu.core_type = #tpu.core_type<tc>, window_params = [{transform_indices = @transform_0, window_bounds = array<i64: 1, 8, 48>}, {transform_indices = @transform_1, window_bounds = array<i64: 8, 128>}, {pipeline_mode = #tpu.pipeline_mode<synchronous>, transform_indices = @transform_2, window_bounds = array<i64: 48, 128>}, {pipeline_mode = #tpu.pipeline_mode<synchronous>, transform_indices = @transform_3, window_bounds = array<i64: 1, 128>}, {pipeline_mode = #tpu.pipeline_mode<synchronous>, transform_indices = @transform_4, window_bounds = array<i64: 256, 512>}, {pipeline_mode = #tpu.pipeline_mode<synchronous>, transform_indices = @transform_5, window_bounds = array<i64: 1, 512>}, {pipeline_mode = #tpu.pipeline_mode<synchronous>, transform_indices = @transform_6, window_bounds = array<i64: 128, 128>}, {pipeline_mode = #tpu.pipeline_mode<synchronous>, transform_indices = @transform_7, window_bounds = array<i64: 1, 128>}, {pipeline_mode = #tpu.pipeline_mode<synchronous>, transform_indices = @transform_8, window_bounds = array<i64: 128, 128>}, {pipeline_mode = #tpu.pipeline_mode<synchronous>, transform_indices = @transform_9, window_bounds = array<i64: 1, 128>}, {transform_indices = @transform_10, window_bounds = array<i64: 1, 8, 128>}, {transform_indices = @transform_11, window_bounds = array<i64: 8, 128>}]} {
    %c0_i32 = arith.constant 0 : i32
    %0 = arith.cmpi eq, %arg1, %c0_i32 : i32
    %1 = arith.extui %0 : i1 to i32
    %c0_i32_0 = arith.constant 0 : i32
    %2 = arith.cmpi ne, %1, %c0_i32_0 : i32
    scf.if %2 {
      %c0_47 = arith.constant 0 : index
      %c0_48 = arith.constant 0 : index
      %76 = vector.load %arg3[%c0_47, %c0_48] : memref<8x128xf32, #tpu.memory_space<vmem>>, vector<8x128xf32>
      %c0_49 = arith.constant 0 : index
      %c0_50 = arith.constant 0 : index
      %77 = vector.load %arg13[%c0_49, %c0_50] : memref<8x128xf32, #tpu.memory_space<vmem>>, vector<8x128xf32>
      tpu.vector_store %arg13[%c0_49, %c0_50], %76 {strides = array<i32>} : memref<8x128xf32, #tpu.memory_space<vmem>>, vector<8x128xf32>,
    } else {
    }
    %c0 = arith.constant 0 : index
    %c0_1 = arith.constant 0 : index
    %c0_2 = arith.constant 0 : index
    %3 = vector.load %arg2[%c0, %c0_1, %c0_2] : memref<1x8x48xf32, #tpu.memory_space<vmem>>, vector<1x8x48xf32>
    %4 = vector.shape_cast %3 : vector<1x8x48xf32> to vector<8x48xf32>
    %5 = arith.truncf %4 : vector<8x48xf32> to vector<8x48xbf16>
    %c0_3 = arith.constant 0 : index
    %c0_4 = arith.constant 0 : index
    %6 = vector.load %arg4[%c0_3, %c0_4] : memref<48x128xbf16, #tpu.memory_space<vmem>>, vector<48x128xbf16>
    %cst = arith.constant dense<0.000000e+00> : vector<8x128xf32>
    %7 = tpu.matmul %5, %6, %cst {dimension_numbers = #tpu.dot_dimension_numbers<[1], [0], [0], [1], [0, 0, 1, 1], [], []>} : vector<8x48xbf16>, vector<48x128xbf16>, vector<8x128xf32> -> vector<8x128xf32>
    %c0_5 = arith.constant 0 : index
    %c0_6 = arith.constant 0 : index
    %8 = vector.load %arg5[%c0_5, %c0_6] : memref<1x128xf32, #tpu.memory_space<vmem>>, vector<1x128xf32>
    %9 = vector.broadcast %8 : vector<1x128xf32> to vector<8x128xf32>
    %10 = arith.addf %7, %9 : vector<8x128xf32>
    %cst_7 = arith.constant 0.000000e+00 : f32
    %11 = vector.broadcast %cst_7 : f32 to vector<8x128xf32>
    %12 = arith.maximumf %10, %11 : vector<8x128xf32>
    %13 = arith.truncf %12 : vector<8x128xf32> to vector<8x128xbf16>
    %c0_8 = arith.constant 0 : index
    %c0_9 = arith.constant 0 : index
    %14 = vector.load %arg6[%c0_8, %c0_9] : memref<256x512xbf16, #tpu.memory_space<vmem>>, vector<128x512xbf16>
    %cst_10 = arith.constant dense<0.000000e+00> : vector<8x512xf32>
    %15 = tpu.matmul %13, %14, %cst_10 {dimension_numbers = #tpu.dot_dimension_numbers<[1], [0], [0], [1], [0, 0, 1, 1], [], []>} : vector<8x128xbf16>, vector<128x512xbf16>, vector<8x512xf32> -> vector<8x512xf32>
    %c0_11 = arith.constant 0 : index
    %c0_12 = arith.constant 0 : index
    %16 = vector.load %arg7[%c0_11, %c0_12] : memref<1x512xf32, #tpu.memory_space<vmem>>, vector<1x512xf32>
    %17 = vector.broadcast %16 : vector<1x512xf32> to vector<8x512xf32>
    %18 = arith.addf %15, %17 : vector<8x512xf32>
    %c0_13 = arith.constant 0 : index
    %c0_14 = arith.constant 0 : index
    %19 = vector.load %arg14[%c0_13, %c0_14] : memref<8x512xf32, #tpu.memory_space<vmem>>, vector<8x512xf32>
    tpu.vector_store %arg14[%c0_13, %c0_14], %18 {strides = array<i32>} : memref<8x512xf32, #tpu.memory_space<vmem>>, vector<8x512xf32>,
    %c0_15 = arith.constant 0 : index
    %c0_16 = arith.constant 0 : index
    %20 = vector.load %arg13[%c0_15, %c0_16] : memref<8x128xf32, #tpu.memory_space<vmem>>, vector<8x128xf32>
    %c0_i32_17 = arith.constant 0 : i32
    %c8_i32 = arith.constant 8 : i32
    %21 = arith.muli %c0_i32_17, %c8_i32 : i32
    %22 = tpu.assume_multiple %21, 8 : i32
    %23 = arith.index_cast %22 : i32 to index
    %c0_18 = arith.constant 0 : index
    %24 = vector.load %arg14[%23, %c0_18] : memref<8x512xf32, #tpu.memory_space<vmem>>, vector<8x512xf32>
    %25 = arith.truncf %20 : vector<8x128xf32> to vector<8x128xbf16>
    %c128 = arith.constant 128 : index
    %c0_19 = arith.constant 0 : index
    %26 = vector.load %arg6[%c128, %c0_19] : memref<256x512xbf16, #tpu.memory_space<vmem>>, vector<128x512xbf16>
    %cst_20 = arith.constant dense<0.000000e+00> : vector<8x512xf32>
    %27 = tpu.matmul %25, %26, %cst_20 {dimension_numbers = #tpu.dot_dimension_numbers<[1], [0], [0], [1], [0, 0, 1, 1], [], []>} : vector<8x128xbf16>, vector<128x512xbf16>, vector<8x512xf32> -> vector<8x512xf32>
    %28 = arith.addf %24, %27 : vector<8x512xf32>
    %29 = vector.extract_strided_slice %28 {offsets = [0, 0], sizes = [8, 128], strides = [1, 1]} : vector<8x512xf32> to vector<8x128xf32>
    %cst_21 = arith.constant 5.000000e-01 : f32
    %30 = vector.broadcast %cst_21 : f32 to vector<8x128xf32>
    %31 = arith.mulf %30, %29 : vector<8x128xf32>
    %32 = math.tanh %31 : vector<8x128xf32>
    %cst_22 = arith.constant 1.000000e+00 : f32
    %33 = vector.broadcast %cst_22 : f32 to vector<8x128xf32>
    %34 = arith.addf %32, %33 : vector<8x128xf32>
    %cst_23 = arith.constant 5.000000e-01 : f32
    %35 = vector.broadcast %cst_23 : f32 to vector<8x128xf32>
    %36 = arith.mulf %35, %34 : vector<8x128xf32>
    %37 = vector.extract_strided_slice %28 {offsets = [0, 128], sizes = [8, 128], strides = [1, 1]} : vector<8x512xf32> to vector<8x128xf32>
    %cst_24 = arith.constant 5.000000e-01 : f32
    %38 = vector.broadcast %cst_24 : f32 to vector<8x128xf32>
    %39 = arith.mulf %38, %37 : vector<8x128xf32>
    %40 = math.tanh %39 : vector<8x128xf32>
    %cst_25 = arith.constant 1.000000e+00 : f32
    %41 = vector.broadcast %cst_25 : f32 to vector<8x128xf32>
    %42 = arith.addf %40, %41 : vector<8x128xf32>
    %cst_26 = arith.constant 5.000000e-01 : f32
    %43 = vector.broadcast %cst_26 : f32 to vector<8x128xf32>
    %44 = arith.mulf %43, %42 : vector<8x128xf32>
    %45 = vector.extract_strided_slice %28 {offsets = [0, 256], sizes = [8, 128], strides = [1, 1]} : vector<8x512xf32> to vector<8x128xf32>
    %46 = vector.extract_strided_slice %28 {offsets = [0, 384], sizes = [8, 128], strides = [1, 1]} : vector<8x512xf32> to vector<8x128xf32>
    %47 = arith.mulf %36, %46 : vector<8x128xf32>
    %48 = arith.addf %45, %47 : vector<8x128xf32>
    %49 = math.tanh %48 : vector<8x128xf32>
    %cst_27 = arith.constant 1.000000e+00 : f32
    %50 = vector.broadcast %cst_27 : f32 to vector<8x128xf32>
    %51 = arith.subf %50, %44 : vector<8x128xf32>
    %52 = arith.mulf %51, %49 : vector<8x128xf32>
    %53 = arith.mulf %44, %20 : vector<8x128xf32>
    %54 = arith.addf %52, %53 : vector<8x128xf32>
    %55 = arith.index_cast %22 : i32 to index
    %c0_28 = arith.constant 0 : index
    %56 = vector.load %arg15[%55, %c0_28] : memref<8x128xf32, #tpu.memory_space<vmem>>, vector<8x128xf32>
    tpu.vector_store %arg15[%55, %c0_28], %54 {strides = array<i32>} : memref<8x128xf32, #tpu.memory_space<vmem>>, vector<8x128xf32>,
    %c1_i32 = arith.constant 1 : i32
    %c0_29 = arith.constant 0 : index
    %c0_30 = arith.constant 0 : index
    %57 = vector.load %arg13[%c0_29, %c0_30] : memref<8x128xf32, #tpu.memory_space<vmem>>, vector<8x128xf32>
    tpu.vector_store %arg13[%c0_29, %c0_30], %54 {strides = array<i32>} : memref<8x128xf32, #tpu.memory_space<vmem>>, vector<8x128xf32>,
    %c0_31 = arith.constant 0 : index
    %c0_32 = arith.constant 0 : index
    %58 = vector.load %arg15[%c0_31, %c0_32] : memref<8x128xf32, #tpu.memory_space<vmem>>, vector<8x128xf32>
    %59 = arith.truncf %58 : vector<8x128xf32> to vector<8x128xbf16>
    %c0_33 = arith.constant 0 : index
    %c0_34 = arith.constant 0 : index
    %60 = vector.load %arg8[%c0_33, %c0_34] : memref<128x128xbf16, #tpu.memory_space<vmem>>, vector<128x128xbf16>
    %cst_35 = arith.constant dense<0.000000e+00> : vector<8x128xf32>
    %61 = tpu.matmul %59, %60, %cst_35 {dimension_numbers = #tpu.dot_dimension_numbers<[1], [0], [0], [1], [0, 0, 1, 1], [], []>} : vector<8x128xbf16>, vector<128x128xbf16>, vector<8x128xf32> -> vector<8x128xf32>
    %c0_36 = arith.constant 0 : index
    %c0_37 = arith.constant 0 : index
    %62 = vector.load %arg9[%c0_36, %c0_37] : memref<1x128xf32, #tpu.memory_space<vmem>>, vector<1x128xf32>
    %63 = vector.broadcast %62 : vector<1x128xf32> to vector<8x128xf32>
    %64 = arith.addf %61, %63 : vector<8x128xf32>
    %cst_38 = arith.constant 0.000000e+00 : f32
    %65 = vector.broadcast %cst_38 : f32 to vector<8x128xf32>
    %66 = arith.maximumf %64, %65 : vector<8x128xf32>
    %67 = arith.truncf %66 : vector<8x128xf32> to vector<8x128xbf16>
    %c0_39 = arith.constant 0 : index
    %c0_40 = arith.constant 0 : index
    %68 = vector.load %arg10[%c0_39, %c0_40] : memref<128x128xbf16, #tpu.memory_space<vmem>>, vector<128x128xbf16>
    %cst_41 = arith.constant dense<0.000000e+00> : vector<8x128xf32>
    %69 = tpu.matmul %67, %68, %cst_41 {dimension_numbers = #tpu.dot_dimension_numbers<[1], [0], [0], [1], [0, 0, 1, 1], [], []>} : vector<8x128xbf16>, vector<128x128xbf16>, vector<8x128xf32> -> vector<8x128xf32>
    %c0_42 = arith.constant 0 : index
    %c0_43 = arith.constant 0 : index
    %70 = vector.load %arg11[%c0_42, %c0_43] : memref<1x128xf32, #tpu.memory_space<vmem>>, vector<1x128xf32>
    %71 = vector.broadcast %70 : vector<1x128xf32> to vector<8x128xf32>
    %72 = arith.addf %69, %71 : vector<8x128xf32>
    %73 = vector.shape_cast %72 : vector<8x128xf32> to vector<1x8x128xf32>
    %74 = arith.truncf %73 : vector<1x8x128xf32> to vector<1x8x128xbf16>
    %c0_44 = arith.constant 0 : index
    %c0_45 = arith.constant 0 : index
    %c0_46 = arith.constant 0 : index
    %75 = vector.load %arg12[%c0_44, %c0_45, %c0_46] : memref<1x8x128xbf16, #tpu.memory_space<vmem>>, vector<1x8x128xbf16>
    tpu.vector_store %arg12[%c0_44, %c0_45, %c0_46], %74 {strides = array<i32>} : memref<1x8x128xbf16, #tpu.memory_space<vmem>>, vector<1x8x128xbf16>,
    return
  }
  func.func @transform_0(%arg0: i32, %arg1: i32) -> (i32, i32, i32) {
    %c0_i32 = arith.constant 0 : i32
    %c0_i32_0 = arith.constant 0 : i32
    return %arg1, %arg0, %c0_i32 : i32, i32, i32
  }
  func.func @transform_1(%arg0: i32, %arg1: i32) -> (i32, i32) {
    %c0_i32 = arith.constant 0 : i32
    %c0_i32_0 = arith.constant 0 : i32
    return %arg0, %c0_i32 : i32, i32
  }
  func.func @transform_2(%arg0: i32, %arg1: i32) -> (i32, i32) {
    %c0_i32 = arith.constant 0 : i32
    %c0_i32_0 = arith.constant 0 : i32
    %c0_i32_1 = arith.constant 0 : i32
    return %c0_i32, %c0_i32_0 : i32, i32
  }
  func.func @transform_3(%arg0: i32, %arg1: i32) -> (i32, i32) {
    %c0_i32 = arith.constant 0 : i32
    %c0_i32_0 = arith.constant 0 : i32
    %c0_i32_1 = arith.constant 0 : i32
    return %c0_i32, %c0_i32_0 : i32, i32
  }
  func.func @transform_4(%arg0: i32, %arg1: i32) -> (i32, i32) {
    %c0_i32 = arith.constant 0 : i32
    %c0_i32_0 = arith.constant 0 : i32
    %c0_i32_1 = arith.constant 0 : i32
    return %c0_i32, %c0_i32_0 : i32, i32
  }
  func.func @transform_5(%arg0: i32, %arg1: i32) -> (i32, i32) {
    %c0_i32 = arith.constant 0 : i32
    %c0_i32_0 = arith.constant 0 : i32
    %c0_i32_1 = arith.constant 0 : i32
    return %c0_i32, %c0_i32_0 : i32, i32
  }
  func.func @transform_6(%arg0: i32, %arg1: i32) -> (i32, i32) {
    %c0_i32 = arith.constant 0 : i32
    %c0_i32_0 = arith.constant 0 : i32
    %c0_i32_1 = arith.constant 0 : i32
    return %c0_i32, %c0_i32_0 : i32, i32
  }
  func.func @transform_7(%arg0: i32, %arg1: i32) -> (i32, i32) {
    %c0_i32 = arith.constant 0 : i32
    %c0_i32_0 = arith.constant 0 : i32
    %c0_i32_1 = arith.constant 0 : i32
    return %c0_i32, %c0_i32_0 : i32, i32
  }
  func.func @transform_8(%arg0: i32, %arg1: i32) -> (i32, i32) {
    %c0_i32 = arith.constant 0 : i32
    %c0_i32_0 = arith.constant 0 : i32
    %c0_i32_1 = arith.constant 0 : i32
    return %c0_i32, %c0_i32_0 : i32, i32
  }
  func.func @transform_9(%arg0: i32, %arg1: i32) -> (i32, i32) {
    %c0_i32 = arith.constant 0 : i32
    %c0_i32_0 = arith.constant 0 : i32
    %c0_i32_1 = arith.constant 0 : i32
    return %c0_i32, %c0_i32_0 : i32, i32
  }
  func.func @transform_10(%arg0: i32, %arg1: i32) -> (i32, i32, i32) {
    %c0_i32 = arith.constant 0 : i32
    %c0_i32_0 = arith.constant 0 : i32
    return %arg1, %arg0, %c0_i32 : i32, i32, i32
  }
  func.func @transform_11(%arg0: i32, %arg1: i32) -> (i32, i32) {
    %c0_i32 = arith.constant 0 : i32
    %c0_i32_0 = arith.constant 0 : i32
    return %arg0, %c0_i32 : i32, i32
  }
}

</mosaic_0001>

<llo_original>
// kernel: tpu_custom_call.1
$region0: #{tpu_custom_call.1}
  #allocation0 [shape = 'u32[]', space=smem, size = 0x4, offset = 0x4, fixed_abs, tag = 'smem constant byte address 0x4 - core index']
  #allocation1 [shape = 'u32[144,128]{1,0:T(1,128)}', space=vmem, size = 0x12000, scoped, tag = 'internal scratch']
  #allocation2 [shape = 'f32[8,512]{1,0:T(8,128)}', space=vmem, size = 0x4000, scoped, tag = 'scratch operand']
  #allocation3 [shape = 'f32[8,128]{1,0:T(8,128)}', space=vmem, size = 0x1000, scoped, tag = 'scratch operand']
  %s0 = inlined_call_operand.vmem [shape: f32[1,8,48], index: 0, kind: input, shape index: {}]
  %s1 = inlined_call_operand.hbm [shape: f32[8,128], index: 1, kind: input, shape index: {}, may-alias: {1,11}]
  %s2 = inlined_call_operand.vmem [shape: bf16[48,128], index: 2, kind: input, shape index: {}]
  %s3 = inlined_call_operand.hbm [shape: f32[1,128], index: 3, kind: input, shape index: {}]
  %s4 = inlined_call_operand.hbm [shape: bf16[256,512], index: 4, kind: input, shape index: {}]
  %s5 = inlined_call_operand.hbm [shape: f32[1,512], index: 5, kind: input, shape index: {}]
  %s6 = inlined_call_operand.hbm [shape: bf16[128,128], index: 6, kind: input, shape index: {}]
  %s7 = inlined_call_operand.hbm [shape: f32[1,128], index: 7, kind: input, shape index: {}]
  %s8 = inlined_call_operand.hbm [shape: bf16[128,128], index: 8, kind: input, shape index: {}]
  %s9 = inlined_call_operand.hbm [shape: f32[1,128], index: 9, kind: input, shape index: {}]
  %s10 = inlined_call_operand.hbm [shape: bf16[1,8,128], index: 10, kind: output, shape index: {0}]
  %s11 = inlined_call_operand.hbm [shape: f32[8,128], index: 11, kind: output, shape index: {1}, may-alias: {1,11}]
  %12 = xla_tuple %s10, %s11
  %s13 = sld [smem:[#allocation0]]
  $region94: #{tpu_custom_call.1} parent=0
    _
  %s15 = ssub.s32 1, %s13
  %s16 = scalar_select 0, %s15, %s13
  $region1: #{tpu_custom_call.1} parent=0
    #allocation4 [shape = 'u8[4096]{0}', space=vmem, size = 0x1000, scoped, tag = 'input window, operand 1, single buffered']
    #allocation5 [shape = 's32[1]{0}', space=sflag, size = 0x4, scoped, tag = 'scoped memory for tpu_custom_call.1']
    #allocation6 [shape = 's32[1]{0}', space=sflag, size = 0x4, scoped, tag = 'scoped memory for tpu_custom_call.1']
    #allocation7 [shape = 'u8[512]{0}', space=vmem, size = 0x400, scoped, tag = 'input window, operand 3, single buffered']
    #allocation8 [shape = 's32[1]{0}', space=sflag, size = 0x4, scoped, tag = 'scoped memory for tpu_custom_call.1']
    #allocation9 [shape = 'u8[262144]{0}', space=vmem, size = 0x40000, scoped, tag = 'input window, operand 4, single buffered']
    #allocation10 [shape = 'u8[2048]{0}', space=vmem, size = 0x800, scoped, tag = 'input window, operand 5, single buffered']
    #allocation11 [shape = 's32[1]{0}', space=sflag, size = 0x4, scoped, tag = 'scoped memory for tpu_custom_call.1']
    #allocation12 [shape = 'u8[32768]{0}', space=vmem, size = 0x8000, scoped, tag = 'input window, operand 6, single buffered']
    #allocation13 [shape = 'u8[512]{0}', space=vmem, size = 0x400, scoped, tag = 'input window, operand 7, single buffered']
    #allocation14 [shape = 's32[1]{0}', space=sflag, size = 0x4, scoped, tag = 'scoped memory for tpu_custom_call.1']
    #allocation15 [shape = 'u8[32768]{0}', space=vmem, size = 0x8000, scoped, tag = 'input window, operand 8, single buffered']
    #allocation16 [shape = 'u8[512]{0}', space=vmem, size = 0x400, scoped, tag = 'input window, operand 9, single buffered']
    #allocation17 [shape = 's32[1]{0}', space=sflag, size = 0x4, scoped, tag = 'scoped memory for tpu_custom_call.1']
    #allocation18 [shape = 'u8[2048]{0}', space=vmem, size = 0x800, scoped, tag = 'output window, operand 0, single buffered']
    #allocation19 [shape = 'u8[4096]{0}', space=vmem, size = 0x1000, scoped, tag = 'output window, operand 1, single buffered']
    #allocation20 [shape = 's32[1]{0}', space=sflag, size = 0x4, scoped, tag = 'scoped memory for tpu_custom_call.1']
    %17 = vsyncpa [#allocation5], 0
    %18 = vsyncpa [#allocation8], 0
    %19 = vsyncpa [#allocation11], 0
    %20 = vsyncpa [#allocation14], 0
    %21 = vsyncpa [#allocation17], 0
    %22 = vsyncpa [#allocation6], 0
    %23 = vsyncpa [#allocation20], 0
    // Predicated region
    $region2: #{tpu_custom_call.1} parent=1 // pred_check
      _
    $region3: #{tpu_custom_call.1} parent=1 // pred_check_branch
      %25 = sbr.rel (0) target = $region5
    $region4: #{tpu_custom_call.1} parent=1 // pred_region
      _
    $region5: #{tpu_custom_call.1} parent=1 // pred_fallthru
      _
    // Predicated region
    $region6: #{tpu_custom_call.1} parent=1 // pred_check
      _
    $region7: #{tpu_custom_call.1} parent=1 // pred_check_branch
      %27 = sbr.rel (0) target = $region9
    $region8: #{tpu_custom_call.1} parent=1 // pred_region
      %s29 = ssub.s32 128, 128
      %30 = vsyncadd [#allocation5], %s29
      %s32 = sshll.u32 [#allocation4], 4
      %s33 = int_to_ptr.vmem [resolvable:$true] %s32
      %35 = dma.hbm_to_vmem [thread:$0]  %s1, 128, %s33, [#allocation5]
    $region9: #{tpu_custom_call.1} parent=1 // pred_fallthru
      _
    // Predicated region
    $region10: #{tpu_custom_call.1} parent=1 // pred_check
      _
    $region11: #{tpu_custom_call.1} parent=1 // pred_check_branch
      %37 = sbr.rel (0) target = $region13
    $region12: #{tpu_custom_call.1} parent=1 // pred_region
      _
    $region13: #{tpu_custom_call.1} parent=1 // pred_fallthru
      _
    // Predicated region
    $region14: #{tpu_custom_call.1} parent=1 // pred_check
      _
    $region15: #{tpu_custom_call.1} parent=1 // pred_check_branch
      %39 = sbr.rel (0) target = $region17
    $region16: #{tpu_custom_call.1} parent=1 // pred_region
      %s41 = ssub.s32 16, 16
      %42 = vsyncadd [#allocation8], %s41
      %s44 = sshll.u32 [#allocation7], 4
      %s45 = int_to_ptr.vmem [resolvable:$true] %s44
      %47 = dma.hbm_to_vmem [thread:$0]  %s3, 16, %s45, [#allocation8]
    $region17: #{tpu_custom_call.1} parent=1 // pred_fallthru
      _
    // Predicated region
    $region18: #{tpu_custom_call.1} parent=1 // pred_check
      _
    $region19: #{tpu_custom_call.1} parent=1 // pred_check_branch
      %49 = sbr.rel (0) target = $region21
    $region20: #{tpu_custom_call.1} parent=1 // pred_region
      %s51 = ssub.s32 8192, 8192
      %52 = vsyncadd [#allocation8], %s51
      %s53 = sshll.u32 [#allocation9], 4
      %s54 = int_to_ptr.vmem [resolvable:$true] %s53
      %59 = dma.hbm_to_vmem [thread:$0]  %s4, 8192, %s54, [#allocation8], 256, 256, 16
    $region21: #{tpu_custom_call.1} parent=1 // pred_fallthru
      _
    // Predicated region
    $region22: #{tpu_custom_call.1} parent=1 // pred_check
      _
    $region23: #{tpu_custom_call.1} parent=1 // pred_check_branch
      %61 = sbr.rel (0) target = $region25
    $region24: #{tpu_custom_call.1} parent=1 // pred_region
      %s63 = ssub.s32 64, 64
      %64 = vsyncadd [#allocation11], %s63
      %s66 = sshll.u32 [#allocation10], 4
      %s67 = int_to_ptr.vmem [resolvable:$true] %s66
      %69 = dma.hbm_to_vmem [thread:$0]  %s5, 64, %s67, [#allocation11]
    $region25: #{tpu_custom_call.1} parent=1 // pred_fallthru
      _
    // Predicated region
    $region26: #{tpu_custom_call.1} parent=1 // pred_check
      _
    $region27: #{tpu_custom_call.1} parent=1 // pred_check_branch
      %71 = sbr.rel (0) target = $region29
    $region28: #{tpu_custom_call.1} parent=1 // pred_region
      %s73 = ssub.s32 1024, 1024
      %74 = vsyncadd [#allocation11], %s73
      %s75 = sshll.u32 [#allocation12], 4
      %s76 = int_to_ptr.vmem [resolvable:$true] %s75
      %81 = dma.hbm_to_vmem [thread:$0]  %s6, 1024, %s76, [#allocation11], 64, 64, 4
    $region29: #{tpu_custom_call.1} parent=1 // pred_fallthru
      _
    // Predicated region
    $region30: #{tpu_custom_call.1} parent=1 // pred_check
      _
    $region31: #{tpu_custom_call.1} parent=1 // pred_check_branch
      %83 = sbr.rel (0) target = $region33
    $region32: #{tpu_custom_call.1} parent=1 // pred_region
      %s85 = ssub.s32 16, 16
      %86 = vsyncadd [#allocation14], %s85
      %s88 = sshll.u32 [#allocation13], 4
      %s89 = int_to_ptr.vmem [resolvable:$true] %s88
      %91 = dma.hbm_to_vmem [thread:$0]  %s7, 16, %s89, [#allocation14]
    $region33: #{tpu_custom_call.1} parent=1 // pred_fallthru
      _
    // Predicated region
    $region34: #{tpu_custom_call.1} parent=1 // pred_check
      _
    $region35: #{tpu_custom_call.1} parent=1 // pred_check_branch
      %93 = sbr.rel (0) target = $region37
    $region36: #{tpu_custom_call.1} parent=1 // pred_region
      %s95 = ssub.s32 1024, 1024
      %96 = vsyncadd [#allocation14], %s95
      %s97 = sshll.u32 [#allocation15], 4
      %s98 = int_to_ptr.vmem [resolvable:$true] %s97
      %103 = dma.hbm_to_vmem [thread:$0]  %s8, 1024, %s98, [#allocation14], 64, 64, 4
    $region37: #{tpu_custom_call.1} parent=1 // pred_fallthru
      _
    // Predicated region
    $region38: #{tpu_custom_call.1} parent=1 // pred_check
      _
    $region39: #{tpu_custom_call.1} parent=1 // pred_check_branch
      %105 = sbr.rel (0) target = $region41
    $region40: #{tpu_custom_call.1} parent=1 // pred_region
      %s107 = ssub.s32 16, 16
      %108 = vsyncadd [#allocation17], %s107
      %s110 = sshll.u32 [#allocation16], 4
      %s111 = int_to_ptr.vmem [resolvable:$true] %s110
      %113 = dma.hbm_to_vmem [thread:$0]  %s9, 16, %s111, [#allocation17]
    $region41: #{tpu_custom_call.1} parent=1 // pred_fallthru
      _
    // Predicated region
    $region42: #{tpu_custom_call.1} parent=1 // pred_check
      _
    $region43: #{tpu_custom_call.1} parent=1 // pred_check_branch
      %115 = sbr.rel (0) target = $region45
    $region44: #{tpu_custom_call.1} parent=1 // pred_region
      %116 = dma.done [#allocation5], 128
    $region45: #{tpu_custom_call.1} parent=1 // pred_fallthru
      _
    // Predicated region
    $region46: #{tpu_custom_call.1} parent=1 // pred_check
      _
    $region47: #{tpu_custom_call.1} parent=1 // pred_check_branch
      %118 = sbr.rel (0) target = $region49
    $region48: #{tpu_custom_call.1} parent=1 // pred_region
      %119 = dma.done [#allocation8], 16
    $region49: #{tpu_custom_call.1} parent=1 // pred_fallthru
      _
    // Predicated region
    $region50: #{tpu_custom_call.1} parent=1 // pred_check
      _
    $region51: #{tpu_custom_call.1} parent=1 // pred_check_branch
      %121 = sbr.rel (0) target = $region53
    $region52: #{tpu_custom_call.1} parent=1 // pred_region
      %122 = dma.done [#allocation8], 8192
    $region53: #{tpu_custom_call.1} parent=1 // pred_fallthru
      _
    // Predicated region
    $region54: #{tpu_custom_call.1} parent=1 // pred_check
      _
    $region55: #{tpu_custom_call.1} parent=1 // pred_check_branch
      %124 = sbr.rel (0) target = $region57
    $region56: #{tpu_custom_call.1} parent=1 // pred_region
      %125 = dma.done [#allocation11], 64
    $region57: #{tpu_custom_call.1} parent=1 // pred_fallthru
      _
    // Predicated region
    $region58: #{tpu_custom_call.1} parent=1 // pred_check
      _
    $region59: #{tpu_custom_call.1} parent=1 // pred_check_branch
      %127 = sbr.rel (0) target = $region61
    $region60: #{tpu_custom_call.1} parent=1 // pred_region
      %128 = dma.done [#allocation11], 1024
    $region61: #{tpu_custom_call.1} parent=1 // pred_fallthru
      _
    // Predicated region
    $region62: #{tpu_custom_call.1} parent=1 // pred_check
      _
    $region63: #{tpu_custom_call.1} parent=1 // pred_check_branch
      %130 = sbr.rel (0) target = $region65
    $region64: #{tpu_custom_call.1} parent=1 // pred_region
      %131 = dma.done [#allocation14], 16
    $region65: #{tpu_custom_call.1} parent=1 // pred_fallthru
      _
    // Predicated region
    $region66: #{tpu_custom_call.1} parent=1 // pred_check
      _
    $region67: #{tpu_custom_call.1} parent=1 // pred_check_branch
      %133 = sbr.rel (0) target = $region69
    $region68: #{tpu_custom_call.1} parent=1 // pred_region
      %134 = dma.done [#allocation14], 1024
    $region69: #{tpu_custom_call.1} parent=1 // pred_fallthru
      _
    // Predicated region
    $region70: #{tpu_custom_call.1} parent=1 // pred_check
      _
    $region71: #{tpu_custom_call.1} parent=1 // pred_check_branch
      %136 = sbr.rel (0) target = $region73
    $region72: #{tpu_custom_call.1} parent=1 // pred_region
      %137 = dma.done [#allocation17], 16
    $region73: #{tpu_custom_call.1} parent=1 // pred_fallthru
      _
    %p139 = scmp.eq.s32.totalorder 0, 0
    // Predicated region
    $region74: #{tpu_custom_call.1} parent=1 // pred_check
      %p140 = pneg %p139
    $region75: #{tpu_custom_call.1} parent=1 // pred_check_branch
      %142 = sbr.rel (%p140) target = $region77
    $region76: #{tpu_custom_call.1} parent=1 // pred_region
      %v143 = vld [vmem:[#allocation4] sm:$0xff]
      %144 = vst [vmem:[#allocation19] sm:$0xff] %v143
    $region77: #{tpu_custom_call.1} parent=1 // pred_fallthru
      _
    %v145 = vld [vmem:[%s0] sm:$0xff]
    %v146 = vpack.c.bf16 %v145, %v145
    %v147 = vld [vmem:[%s2] sm:$0xf]
    %v148 = vld [vmem:[%s2 + $0x4] sm:$0xf]
    %v149 = vld [vmem:[%s2 + $0x8] sm:$0xf]
    %v150 = vld [vmem:[%s2 + $0xc] sm:$0xf]
    %v151 = vld [vmem:[%s2 + $0x10] sm:$0xf]
    %v152 = vld [vmem:[%s2 + $0x14] sm:$0xf]
    %v153 = vld [vmem:[#allocation7] sm:$0x1]
    %v155 = vlaneseq
    %v156 = vshrl.u32 %v155, 7
    %v157 = vsub.s32 0, %v156
    %v158 = vrot.slane %v153, %v157
    %v166 = vunpack.c.l.b16 %v147
    %v167 = vunpack.c.l.b16 %v148
    %v168 = vunpack.c.l.b16 %v149
    %v169 = vunpack.c.l.b16 %v150
    %v170 = vunpack.c.l.b16 %v151
    %v171 = vunpack.c.l.b16 %v152
    %v172 = vpack.c.b16 %v167, %v166
    %v173 = vpack.c.b16 %v169, %v168
    %v174 = vpack.c.b16 %v171, %v170
    %vm178 = vcmask 392192
    %v180 = vsel %vm178, %v146, 0
    %182 = vmatprep.subr.bf16.mxu0 0
    %183 = vmatpush1.bf16.msra.mxu0 0
    %184 = vmatprep.subr.bf16.mxu0 0
    %185 = vmatpush1.bf16.msra.mxu0 0
    %186 = vmatprep.subr.bf16.mxu0 0
    %187 = vmatpush1.bf16.msra.mxu0 0
    %188 = vmatprep.subr.bf16.mxu0 0
    %189 = vmatpush1.bf16.msra.mxu0 0
    %190 = vmatprep.subr.bf16.mxu0 0
    %191 = vmatpush1.bf16.msra.mxu0 0
    %192 = vmatprep.subr.bf16.mxu0 0
    %193 = vmatpush1.bf16.msra.mxu0 %v174
    %194 = vmatprep.subr.bf16.mxu0 0
    %195 = vmatpush1.bf16.msra.mxu0 %v173
    %196 = vmatprep.subr.bf16.mxu0 0
    %197 = vmatpush1.bf16.msra.mxu0 %v172
    %198 = vmatprep.subr.bf16.mxu0 0
    %199 = vmatpush2.bf16.msra.mxu0 0
    %200 = vmatprep.subr.bf16.mxu0 0
    %201 = vmatpush2.bf16.msra.mxu0 0
    %202 = vmatprep.subr.bf16.mxu0 0
    %203 = vmatpush2.bf16.msra.mxu0 0
    %204 = vmatprep.subr.bf16.mxu0 0
    %205 = vmatpush2.bf16.msra.mxu0 0
    %206 = vmatprep.subr.bf16.mxu0 0
    %207 = vmatpush2.bf16.msra.mxu0 0
    %208 = vmatprep.subr.bf16.mxu0 0
    %209 = vmatpush2.bf16.msra.mxu0 0
    %210 = vmatprep.subr.bf16.mxu0 0
    %211 = vmatpush2.bf16.msra.mxu0 0
    %212 = vmatprep.subr.bf16.mxu0 0
    %213 = vmatpush2.bf16.msra.mxu0 0
    %214 = vmatprep.mubr.bf16.mxu0 0
    %215 = vmatmul.mubr.bf16.gmra.mxu0 %v180
    %v216 = vpop.f32.mrf.mxu0
    %v217 = vadd.f32 %v158, %v216
    %v218 = vpop.f32.mrf.mxu0
    %v219 = vpop.f32.mrf.mxu0
    %v220 = vpop.f32.mrf.mxu0
    %221 = vdwg.mxu0
    %v222 = vmax.f32 %v217, 0.0
    %v223 = vpack.c.bf16 %v222, %v222
    %v224 = vld [vmem:[#allocation9] sm:$0xff]
    %v225 = vld [vmem:[#allocation9 + $0x8] sm:$0xff]
    %v226 = vld [vmem:[#allocation9 + $0x10] sm:$0xff]
    %v227 = vld [vmem:[#allocation9 + $0x18] sm:$0xff]
    %v228 = vld [vmem:[#allocation9 + $0x20] sm:$0xff]
    %v229 = vld [vmem:[#allocation9 + $0x28] sm:$0xff]
    %v230 = vld [vmem:[#allocation9 + $0x30] sm:$0xff]
    %v231 = vld [vmem:[#allocation9 + $0x38] sm:$0xff]
    %v232 = vld [vmem:[#allocation9 + $0x40] sm:$0xff]
    %v233 = vld [vmem:[#allocation9 + $0x48] sm:$0xff]
    %v234 = vld [vmem:[#allocation9 + $0x50] sm:$0xff]
    %v235 = vld [vmem:[#allocation9 + $0x58] sm:$0xff]
    %v236 = vld [vmem:[#allocation9 + $0x60] sm:$0xff]
    %v237 = vld [vmem:[#allocation9 + $0x68] sm:$0xff]
    %v238 = vld [vmem:[#allocation9 + $0x70] sm:$0xff]
    %v239 = vld [vmem:[#allocation9 + $0x78] sm:$0xff]
    %v240 = vld [vmem:[#allocation9 + $0x80] sm:$0xff]
    %v241 = vld [vmem:[#allocation9 + $0x88] sm:$0xff]
    %v242 = vld [vmem:[#allocation9 + $0x90] sm:$0xff]
    %v243 = vld [vmem:[#allocation9 + $0x98] sm:$0xff]
    %v244 = vld [vmem:[#allocation9 + $0xa0] sm:$0xff]
    %v245 = vld [vmem:[#allocation9 + $0xa8] sm:$0xff]
    %v246 = vld [vmem:[#allocation9 + $0xb0] sm:$0xff]
    %v247 = vld [vmem:[#allocation9 + $0xb8] sm:$0xff]
    %v248 = vld [vmem:[#allocation9 + $0xc0] sm:$0xff]
    %v249 = vld [vmem:[#allocation9 + $0xc8] sm:$0xff]
    %v250 = vld [vmem:[#allocation9 + $0xd0] sm:$0xff]
    %v251 = vld [vmem:[#allocation9 + $0xd8] sm:$0xff]
    %v252 = vld [vmem:[#allocation9 + $0xe0] sm:$0xff]
    %v253 = vld [vmem:[#allocation9 + $0xe8] sm:$0xff]
    %v254 = vld [vmem:[#allocation9 + $0xf0] sm:$0xff]
    %v255 = vld [vmem:[#allocation9 + $0xf8] sm:$0xff]
    %v256 = vld [vmem:[#allocation10] sm:$0xf]
    %v258 = vlaneseq
    %v259 = vshrl.u32 %v258, 7
    %v260 = vsub.s32 0, %v259
    %v261 = vrot.slane %v256, %v260
    %v262 = vlaneseq
    %v263 = vshrl.u32 %v262, 7
    %v264 = vsub.s32 1, %v263
    %v265 = vrot.slane %v256, %v264
    %v266 = vlaneseq
    %v267 = vshrl.u32 %v266, 7
    %v268 = vsub.s32 2, %v267
    %v269 = vrot.slane %v256, %v268
    %v270 = vlaneseq
    %v271 = vshrl.u32 %v270, 7
    %v272 = vsub.s32 3, %v271
    %v273 = vrot.slane %v256, %v272
    %v310 = vunpack.c.l.b16 %v224
    %v311 = vunpack.c.h.b16 %v224
    %v312 = vunpack.c.l.b16 %v225
    %v313 = vunpack.c.h.b16 %v225
    %v314 = vunpack.c.l.b16 %v226
    %v315 = vunpack.c.h.b16 %v226
    %v316 = vunpack.c.l.b16 %v227
    %v317 = vunpack.c.h.b16 %v227
    %v318 = vunpack.c.l.b16 %v228
    %v319 = vunpack.c.h.b16 %v228
    %v320 = vunpack.c.l.b16 %v229
    %v321 = vunpack.c.h.b16 %v229
    %v322 = vunpack.c.l.b16 %v230
    %v323 = vunpack.c.h.b16 %v230
    %v324 = vunpack.c.l.b16 %v231
    %v325 = vunpack.c.h.b16 %v231
    %v326 = vunpack.c.l.b16 %v232
    %v327 = vunpack.c.h.b16 %v232
    %v328 = vunpack.c.l.b16 %v233
    %v329 = vunpack.c.h.b16 %v233
    %v330 = vunpack.c.l.b16 %v234
    %v331 = vunpack.c.h.b16 %v234
    %v332 = vunpack.c.l.b16 %v235
    %v333 = vunpack.c.h.b16 %v235
    %v334 = vunpack.c.l.b16 %v236
    %v335 = vunpack.c.h.b16 %v236
    %v336 = vunpack.c.l.b16 %v237
    %v337 = vunpack.c.h.b16 %v237
    %v338 = vunpack.c.l.b16 %v238
    %v339 = vunpack.c.h.b16 %v238
    %v340 = vunpack.c.l.b16 %v239
    %v341 = vunpack.c.h.b16 %v239
    %v342 = vunpack.c.l.b16 %v240
    %v343 = vunpack.c.h.b16 %v240
    %v344 = vunpack.c.l.b16 %v241
    %v345 = vunpack.c.h.b16 %v241
    %v346 = vunpack.c.l.b16 %v242
    %v347 = vunpack.c.h.b16 %v242
    %v348 = vunpack.c.l.b16 %v243
    %v349 = vunpack.c.h.b16 %v243
    %v350 = vunpack.c.l.b16 %v244
    %v351 = vunpack.c.h.b16 %v244
    %v352 = vunpack.c.l.b16 %v245
    %v353 = vunpack.c.h.b16 %v245
    %v354 = vunpack.c.l.b16 %v246
    %v355 = vunpack.c.h.b16 %v246
    %v356 = vunpack.c.l.b16 %v247
    %v357 = vunpack.c.h.b16 %v247
    %v358 = vunpack.c.l.b16 %v248
    %v359 = vunpack.c.h.b16 %v248
    %v360 = vunpack.c.l.b16 %v249
    %v361 = vunpack.c.h.b16 %v249
    %v362 = vunpack.c.l.b16 %v250
    %v363 = vunpack.c.h.b16 %v250
    %v364 = vunpack.c.l.b16 %v251
    %v365 = vunpack.c.h.b16 %v251
    %v366 = vunpack.c.l.b16 %v252
    %v367 = vunpack.c.h.b16 %v252
    %v368 = vunpack.c.l.b16 %v253
    %v369 = vunpack.c.h.b16 %v253
    %v370 = vunpack.c.l.b16 %v254
    %v371 = vunpack.c.h.b16 %v254
    %v372 = vunpack.c.l.b16 %v255
    %v373 = vunpack.c.h.b16 %v255
    %v374 = vpack.c.b16 %v314, %v310
    %v375 = vpack.c.b16 %v315, %v311
    %v376 = vpack.c.b16 %v316, %v312
    %v377 = vpack.c.b16 %v317, %v313
    %v378 = vpack.c.b16 %v322, %v318
    %v379 = vpack.c.b16 %v323, %v319
    %v380 = vpack.c.b16 %v324, %v320
    %v381 = vpack.c.b16 %v325, %v321
    %v382 = vpack.c.b16 %v330, %v326
    %v383 = vpack.c.b16 %v331, %v327
    %v384 = vpack.c.b16 %v332, %v328
    %v385 = vpack.c.b16 %v333, %v329
    %v386 = vpack.c.b16 %v338, %v334
    %v387 = vpack.c.b16 %v339, %v335
    %v388 = vpack.c.b16 %v340, %v336
    %v389 = vpack.c.b16 %v341, %v337
    %v390 = vpack.c.b16 %v346, %v342
    %v391 = vpack.c.b16 %v347, %v343
    %v392 = vpack.c.b16 %v348, %v344
    %v393 = vpack.c.b16 %v349, %v345
    %v394 = vpack.c.b16 %v354, %v350
    %v395 = vpack.c.b16 %v355, %v351
    %v396 = vpack.c.b16 %v356, %v352
    %v397 = vpack.c.b16 %v357, %v353
    %v398 = vpack.c.b16 %v362, %v358
    %v399 = vpack.c.b16 %v363, %v359
    %v400 = vpack.c.b16 %v364, %v360
    %v401 = vpack.c.b16 %v365, %v361
    %v402 = vpack.c.b16 %v370, %v366
    %v403 = vpack.c.b16 %v371, %v367
    %v404 = vpack.c.b16 %v372, %v368
    %v405 = vpack.c.b16 %v373, %v369
    %438 = vmatprep.subr.bf16.mxu0 %v403
    %439 = vmatpush1.bf16.msra.mxu0 %v402
    %440 = vmatprep.subr.bf16.mxu0 %v399
    %441 = vmatpush1.bf16.msra.mxu0 %v398
    %442 = vmatprep.subr.bf16.mxu0 %v395
    %443 = vmatpush1.bf16.msra.mxu0 %v394
    %444 = vmatprep.subr.bf16.mxu0 %v391
    %445 = vmatpush1.bf16.msra.mxu0 %v390
    %446 = vmatprep.subr.bf16.mxu0 %v387
    %447 = vmatpush1.bf16.msra.mxu0 %v386
    %448 = vmatprep.subr.bf16.mxu0 %v383
    %449 = vmatpush1.bf16.msra.mxu0 %v382
    %450 = vmatprep.subr.bf16.mxu0 %v379
    %451 = vmatpush1.bf16.msra.mxu0 %v378
    %452 = vmatprep.subr.bf16.mxu0 %v375
    %453 = vmatpush1.bf16.msra.mxu0 %v374
    %454 = vmatprep.subr.bf16.mxu0 0
    %455 = vmatpush2.bf16.msra.mxu0 0
    %456 = vmatprep.subr.bf16.mxu0 0
    %457 = vmatpush2.bf16.msra.mxu0 0
    %458 = vmatprep.subr.bf16.mxu0 0
    %459 = vmatpush2.bf16.msra.mxu0 0
    %460 = vmatprep.subr.bf16.mxu0 0
    %461 = vmatpush2.bf16.msra.mxu0 0
    %462 = vmatprep.subr.bf16.mxu0 0
    %463 = vmatpush2.bf16.msra.mxu0 0
    %464 = vmatprep.subr.bf16.mxu0 0
    %465 = vmatpush2.bf16.msra.mxu0 0
    %466 = vmatprep.subr.bf16.mxu0 0
    %467 = vmatpush2.bf16.msra.mxu0 0
    %468 = vmatprep.subr.bf16.mxu0 0
    %469 = vmatpush2.bf16.msra.mxu0 0
    %470 = vmatprep.mubr.bf16.mxu0 0
    %471 = vmatmul.mubr.bf16.gmra.mxu0 %v223
    %v472 = vpop.f32.mrf.mxu0
    %v473 = vadd.f32 %v261, %v472
    %v474 = vpop.f32.mrf.mxu0
    %v475 = vadd.f32 %v265, %v474
    %v476 = vpop.f32.mrf.mxu0
    %v477 = vpop.f32.mrf.mxu0
    %478 = vdwg.mxu0
    %479 = vmatprep.subr.bf16.mxu0 %v405
    %480 = vmatpush1.bf16.msra.mxu0 %v404
    %481 = vmatprep.subr.bf16.mxu0 %v401
    %482 = vmatpush1.bf16.msra.mxu0 %v400
    %483 = vmatprep.subr.bf16.mxu0 %v397
    %484 = vmatpush1.bf16.msra.mxu0 %v396
    %485 = vmatprep.subr.bf16.mxu0 %v393
    %486 = vmatpush1.bf16.msra.mxu0 %v392
    %487 = vmatprep.subr.bf16.mxu0 %v389
    %488 = vmatpush1.bf16.msra.mxu0 %v388
    %489 = vmatprep.subr.bf16.mxu0 %v385
    %490 = vmatpush1.bf16.msra.mxu0 %v384
    %491 = vmatprep.subr.bf16.mxu0 %v381
    %492 = vmatpush1.bf16.msra.mxu0 %v380
    %493 = vmatprep.subr.bf16.mxu0 %v377
    %494 = vmatpush1.bf16.msra.mxu0 %v376
    %495 = vmatprep.subr.bf16.mxu0 0
    %496 = vmatpush2.bf16.msra.mxu0 0
    %497 = vmatprep.subr.bf16.mxu0 0
    %498 = vmatpush2.bf16.msra.mxu0 0
    %499 = vmatprep.subr.bf16.mxu0 0
    %500 = vmatpush2.bf16.msra.mxu0 0
    %501 = vmatprep.subr.bf16.mxu0 0
    %502 = vmatpush2.bf16.msra.mxu0 0
    %503 = vmatprep.subr.bf16.mxu0 0
    %504 = vmatpush2.bf16.msra.mxu0 0
    %505 = vmatprep.subr.bf16.mxu0 0
    %506 = vmatpush2.bf16.msra.mxu0 0
    %507 = vmatprep.subr.bf16.mxu0 0
    %508 = vmatpush2.bf16.msra.mxu0 0
    %509 = vmatprep.subr.bf16.mxu0 0
    %510 = vmatpush2.bf16.msra.mxu0 0
    %511 = vmatprep.mubr.bf16.mxu0 0
    %512 = vmatmul.mubr.bf16.gmra.mxu0 %v223
    %v513 = vpop.f32.mrf.mxu0
    %v514 = vadd.f32 %v269, %v513
    %v515 = vpop.f32.mrf.mxu0
    %v516 = vadd.f32 %v273, %v515
    %v517 = vpop.f32.mrf.mxu0
    %v518 = vpop.f32.mrf.mxu0
    %519 = vdwg.mxu0
    %520 = vst [vmem:[#allocation2] sm:$0xff] %v473
    %521 = vst [vmem:[#allocation2 + $0x8] sm:$0xff] %v475
    %522 = vst [vmem:[#allocation2 + $0x10] sm:$0xff] %v514
    %523 = vst [vmem:[#allocation2 + $0x18] sm:$0xff] %v516
    %v524 = vld [vmem:[#allocation19] sm:$0xff]
    %s525 = smul.u32 0, 4
    %s526 = smul.addr %s525, 8
    %s527 = scalar_lea.vmem [#allocation2], %s526
    %v528 = vld [vmem:[%s527] sm:$0xff]
    %v529 = vld [vmem:[%s527 + $0x8] sm:$0xff]
    %v530 = vld [vmem:[%s527 + $0x10] sm:$0xff]
    %v531 = vld [vmem:[%s527 + $0x18] sm:$0xff]
    %v532 = vpack.c.bf16 %v524, %v524
    %v533 = vld [vmem:[#allocation9 + $0x100] sm:$0xff]
    %v534 = vld [vmem:[#allocation9 + $0x108] sm:$0xff]
    %v535 = vld [vmem:[#allocation9 + $0x110] sm:$0xff]
    %v536 = vld [vmem:[#allocation9 + $0x118] sm:$0xff]
    %v537 = vld [vmem:[#allocation9 + $0x120] sm:$0xff]
    %v538 = vld [vmem:[#allocation9 + $0x128] sm:$0xff]
    %v539 = vld [vmem:[#allocation9 + $0x130] sm:$0xff]
    %v540 = vld [vmem:[#allocation9 + $0x138] sm:$0xff]
    %v541 = vld [vmem:[#allocation9 + $0x140] sm:$0xff]
    %v542 = vld [vmem:[#allocation9 + $0x148] sm:$0xff]
    %v543 = vld [vmem:[#allocation9 + $0x150] sm:$0xff]
    %v544 = vld [vmem:[#allocation9 + $0x158] sm:$0xff]
    %v545 = vld [vmem:[#allocation9 + $0x160] sm:$0xff]
    %v546 = vld [vmem:[#allocation9 + $0x168] sm:$0xff]
    %v547 = vld [vmem:[#allocation9 + $0x170] sm:$0xff]
    %v548 = vld [vmem:[#allocation9 + $0x178] sm:$0xff]
    %v549 = vld [vmem:[#allocation9 + $0x180] sm:$0xff]
    %v550 = vld [vmem:[#allocation9 + $0x188] sm:$0xff]
    %v551 = vld [vmem:[#allocation9 + $0x190] sm:$0xff]
    %v552 = vld [vmem:[#allocation9 + $0x198] sm:$0xff]
    %v553 = vld [vmem:[#allocation9 + $0x1a0] sm:$0xff]
    %v554 = vld [vmem:[#allocation9 + $0x1a8] sm:$0xff]
    %v555 = vld [vmem:[#allocation9 + $0x1b0] sm:$0xff]
    %v556 = vld [vmem:[#allocation9 + $0x1b8] sm:$0xff]
    %v557 = vld [vmem:[#allocation9 + $0x1c0] sm:$0xff]
    %v558 = vld [vmem:[#allocation9 + $0x1c8] sm:$0xff]
    %v559 = vld [vmem:[#allocation9 + $0x1d0] sm:$0xff]
    %v560 = vld [vmem:[#allocation9 + $0x1d8] sm:$0xff]
    %v561 = vld [vmem:[#allocation9 + $0x1e0] sm:$0xff]
    %v562 = vld [vmem:[#allocation9 + $0x1e8] sm:$0xff]
    %v563 = vld [vmem:[#allocation9 + $0x1f0] sm:$0xff]
    %v564 = vld [vmem:[#allocation9 + $0x1f8] sm:$0xff]
    %v597 = vunpack.c.l.b16 %v533
    %v598 = vunpack.c.h.b16 %v533
    %v599 = vunpack.c.l.b16 %v534
    %v600 = vunpack.c.h.b16 %v534
    %v601 = vunpack.c.l.b16 %v535
    %v602 = vunpack.c.h.b16 %v535
    %v603 = vunpack.c.l.b16 %v536
    %v604 = vunpack.c.h.b16 %v536
    %v605 = vunpack.c.l.b16 %v537
    %v606 = vunpack.c.h.b16 %v537
    %v607 = vunpack.c.l.b16 %v538
    %v608 = vunpack.c.h.b16 %v538
    %v609 = vunpack.c.l.b16 %v539
    %v610 = vunpack.c.h.b16 %v539
    %v611 = vunpack.c.l.b16 %v540
    %v612 = vunpack.c.h.b16 %v540
    %v613 = vunpack.c.l.b16 %v541
    %v614 = vunpack.c.h.b16 %v541
    %v615 = vunpack.c.l.b16 %v542
    %v616 = vunpack.c.h.b16 %v542
    %v617 = vunpack.c.l.b16 %v543
    %v618 = vunpack.c.h.b16 %v543
    %v619 = vunpack.c.l.b16 %v544
    %v620 = vunpack.c.h.b16 %v544
    %v621 = vunpack.c.l.b16 %v545
    %v622 = vunpack.c.h.b16 %v545
    %v623 = vunpack.c.l.b16 %v546
    %v624 = vunpack.c.h.b16 %v546
    %v625 = vunpack.c.l.b16 %v547
    %v626 = vunpack.c.h.b16 %v547
    %v627 = vunpack.c.l.b16 %v548
    %v628 = vunpack.c.h.b16 %v548
    %v629 = vunpack.c.l.b16 %v549
    %v630 = vunpack.c.h.b16 %v549
    %v631 = vunpack.c.l.b16 %v550
    %v632 = vunpack.c.h.b16 %v550
    %v633 = vunpack.c.l.b16 %v551
    %v634 = vunpack.c.h.b16 %v551
    %v635 = vunpack.c.l.b16 %v552
    %v636 = vunpack.c.h.b16 %v552
    %v637 = vunpack.c.l.b16 %v553
    %v638 = vunpack.c.h.b16 %v553
    %v639 = vunpack.c.l.b16 %v554
    %v640 = vunpack.c.h.b16 %v554
    %v641 = vunpack.c.l.b16 %v555
    %v642 = vunpack.c.h.b16 %v555
    %v643 = vunpack.c.l.b16 %v556
    %v644 = vunpack.c.h.b16 %v556
    %v645 = vunpack.c.l.b16 %v557
    %v646 = vunpack.c.h.b16 %v557
    %v647 = vunpack.c.l.b16 %v558
    %v648 = vunpack.c.h.b16 %v558
    %v649 = vunpack.c.l.b16 %v559
    %v650 = vunpack.c.h.b16 %v559
    %v651 = vunpack.c.l.b16 %v560
    %v652 = vunpack.c.h.b16 %v560
    %v653 = vunpack.c.l.b16 %v561
    %v654 = vunpack.c.h.b16 %v561
    %v655 = vunpack.c.l.b16 %v562
    %v656 = vunpack.c.h.b16 %v562
    %v657 = vunpack.c.l.b16 %v563
    %v658 = vunpack.c.h.b16 %v563
    %v659 = vunpack.c.l.b16 %v564
    %v660 = vunpack.c.h.b16 %v564
    %v661 = vpack.c.b16 %v601, %v597
    %v662 = vpack.c.b16 %v602, %v598
    %v663 = vpack.c.b16 %v603, %v599
    %v664 = vpack.c.b16 %v604, %v600
    %v665 = vpack.c.b16 %v609, %v605
    %v666 = vpack.c.b16 %v610, %v606
    %v667 = vpack.c.b16 %v611, %v607
    %v668 = vpack.c.b16 %v612, %v608
    %v669 = vpack.c.b16 %v617, %v613
    %v670 = vpack.c.b16 %v618, %v614
    %v671 = vpack.c.b16 %v619, %v615
    %v672 = vpack.c.b16 %v620, %v616
    %v673 = vpack.c.b16 %v625, %v621
    %v674 = vpack.c.b16 %v626, %v622
    %v675 = vpack.c.b16 %v627, %v623
    %v676 = vpack.c.b16 %v628, %v624
    %v677 = vpack.c.b16 %v633, %v629
    %v678 = vpack.c.b16 %v634, %v630
    %v679 = vpack.c.b16 %v635, %v631
    %v680 = vpack.c.b16 %v636, %v632
    %v681 = vpack.c.b16 %v641, %v637
    %v682 = vpack.c.b16 %v642, %v638
    %v683 = vpack.c.b16 %v643, %v639
    %v684 = vpack.c.b16 %v644, %v640
    %v685 = vpack.c.b16 %v649, %v645
    %v686 = vpack.c.b16 %v650, %v646
    %v687 = vpack.c.b16 %v651, %v647
    %v688 = vpack.c.b16 %v652, %v648
    %v689 = vpack.c.b16 %v657, %v653
    %v690 = vpack.c.b16 %v658, %v654
    %v691 = vpack.c.b16 %v659, %v655
    %v692 = vpack.c.b16 %v660, %v656
    %725 = vmatprep.subr.bf16.mxu0 %v690
    %726 = vmatpush1.bf16.msra.mxu0 %v689
    %727 = vmatprep.subr.bf16.mxu0 %v686
    %728 = vmatpush1.bf16.msra.mxu0 %v685
    %729 = vmatprep.subr.bf16.mxu0 %v682
    %730 = vmatpush1.bf16.msra.mxu0 %v681
    %731 = vmatprep.subr.bf16.mxu0 %v678
    %732 = vmatpush1.bf16.msra.mxu0 %v677
    %733 = vmatprep.subr.bf16.mxu0 %v674
    %734 = vmatpush1.bf16.msra.mxu0 %v673
    %735 = vmatprep.subr.bf16.mxu0 %v670
    %736 = vmatpush1.bf16.msra.mxu0 %v669
    %737 = vmatprep.subr.bf16.mxu0 %v666
    %738 = vmatpush1.bf16.msra.mxu0 %v665
    %739 = vmatprep.subr.bf16.mxu0 %v662
    %740 = vmatpush1.bf16.msra.mxu0 %v661
    %741 = vmatprep.subr.bf16.mxu0 0
    %742 = vmatpush2.bf16.msra.mxu0 0
    %743 = vmatprep.subr.bf16.mxu0 0
    %744 = vmatpush2.bf16.msra.mxu0 0
    %745 = vmatprep.subr.bf16.mxu0 0
    %746 = vmatpush2.bf16.msra.mxu0 0
    %747 = vmatprep.subr.bf16.mxu0 0
    %748 = vmatpush2.bf16.msra.mxu0 0
    %749 = vmatprep.subr.bf16.mxu0 0
    %750 = vmatpush2.bf16.msra.mxu0 0
    %751 = vmatprep.subr.bf16.mxu0 0
    %752 = vmatpush2.bf16.msra.mxu0 0
    %753 = vmatprep.subr.bf16.mxu0 0
    %754 = vmatpush2.bf16.msra.mxu0 0
    %755 = vmatprep.subr.bf16.mxu0 0
    %756 = vmatpush2.bf16.msra.mxu0 0
    %757 = vmatprep.mubr.bf16.mxu0 0
    %758 = vmatmul.mubr.bf16.gmra.mxu0 %v532
    %v759 = vpop.f32.mrf.mxu0
    %v760 = vadd.f32 0.0, %v759
    %v761 = vpop.f32.mrf.mxu0
    %v762 = vadd.f32 0.0, %v761
    %v763 = vpop.f32.mrf.mxu0
    %v764 = vpop.f32.mrf.mxu0
    %765 = vdwg.mxu0
    %766 = vmatprep.subr.bf16.mxu0 %v692
    %767 = vmatpush1.bf16.msra.mxu0 %v691
    %768 = vmatprep.subr.bf16.mxu0 %v688
    %769 = vmatpush1.bf16.msra.mxu0 %v687
    %770 = vmatprep.subr.bf16.mxu0 %v684
    %771 = vmatpush1.bf16.msra.mxu0 %v683
    %772 = vmatprep.subr.bf16.mxu0 %v680
    %773 = vmatpush1.bf16.msra.mxu0 %v679
    %774 = vmatprep.subr.bf16.mxu0 %v676
    %775 = vmatpush1.bf16.msra.mxu0 %v675
    %776 = vmatprep.subr.bf16.mxu0 %v672
    %777 = vmatpush1.bf16.msra.mxu0 %v671
    %778 = vmatprep.subr.bf16.mxu0 %v668
    %779 = vmatpush1.bf16.msra.mxu0 %v667
    %780 = vmatprep.subr.bf16.mxu0 %v664
    %781 = vmatpush1.bf16.msra.mxu0 %v663
    %782 = vmatprep.subr.bf16.mxu0 0
    %783 = vmatpush2.bf16.msra.mxu0 0
    %784 = vmatprep.subr.bf16.mxu0 0
    %785 = vmatpush2.bf16.msra.mxu0 0
    %786 = vmatprep.subr.bf16.mxu0 0
    %787 = vmatpush2.bf16.msra.mxu0 0
    %788 = vmatprep.subr.bf16.mxu0 0
    %789 = vmatpush2.bf16.msra.mxu0 0
    %790 = vmatprep.subr.bf16.mxu0 0
    %791 = vmatpush2.bf16.msra.mxu0 0
    %792 = vmatprep.subr.bf16.mxu0 0
    %793 = vmatpush2.bf16.msra.mxu0 0
    %794 = vmatprep.subr.bf16.mxu0 0
    %795 = vmatpush2.bf16.msra.mxu0 0
    %796 = vmatprep.subr.bf16.mxu0 0
    %797 = vmatpush2.bf16.msra.mxu0 0
    %798 = vmatprep.mubr.bf16.mxu0 0
    %799 = vmatmul.mubr.bf16.gmra.mxu0 %v532
    %v800 = vpop.f32.mrf.mxu0
    %v801 = vadd.f32 0.0, %v800
    %v802 = vpop.f32.mrf.mxu0
    %v803 = vadd.f32 0.0, %v802
    %v804 = vpop.f32.mrf.mxu0
    %v805 = vpop.f32.mrf.mxu0
    %806 = vdwg.mxu0
    %v807 = vadd.f32 %v528, %v760
    %v808 = vadd.f32 %v529, %v762
    %v809 = vadd.f32 %v530, %v801
    %v810 = vadd.f32 %v531, %v803
    %v811 = vmul.f32 %v807, 0.5
    %v812 = vtanh.pop %v811
    %v813 = vadd.f32 %v812, 1.0
    %v814 = vmul.f32 %v813, 0.5
    %v815 = vmul.f32 %v808, 0.5
    %v816 = vtanh.pop %v815
    %v817 = vadd.f32 %v816, 1.0
    %v818 = vmul.f32 %v817, 0.5
    %v819 = vmul.f32 %v814, %v810
    %v820 = vadd.f32 %v809, %v819
    %v821 = vtanh.pop %v820
    %v822 = vsub.f32 1.0, %v818
    %v823 = vmul.f32 %v822, %v821
    %v824 = vmul.f32 %v818, %v524
    %v825 = vadd.f32 %v823, %v824
    %826 = vst [vmem:[#allocation3] sm:$0xff] %v825
    %827 = vst [vmem:[#allocation19] sm:$0xff] %v825
    %v828 = vld [vmem:[#allocation3] sm:$0xff]
    %v829 = vpack.c.bf16 %v828, %v828
    %v830 = vld [vmem:[#allocation12] sm:$0xf]
    %v831 = vld [vmem:[#allocation12 + $0x4] sm:$0xf]
    %v832 = vld [vmem:[#allocation12 + $0x8] sm:$0xf]
    %v833 = vld [vmem:[#allocation12 + $0xc] sm:$0xf]
    %v834 = vld [vmem:[#allocation12 + $0x10] sm:$0xf]
    %v835 = vld [vmem:[#allocation12 + $0x14] sm:$0xf]
    %v836 = vld [vmem:[#allocation12 + $0x18] sm:$0xf]
    %v837 = vld [vmem:[#allocation12 + $0x1c] sm:$0xf]
    %v838 = vld [vmem:[#allocation12 + $0x20] sm:$0xf]
    %v839 = vld [vmem:[#allocation12 + $0x24] sm:$0xf]
    %v840 = vld [vmem:[#allocation12 + $0x28] sm:$0xf]
    %v841 = vld [vmem:[#allocation12 + $0x2c] sm:$0xf]
    %v842 = vld [vmem:[#allocation12 + $0x30] sm:$0xf]
    %v843 = vld [vmem:[#allocation12 + $0x34] sm:$0xf]
    %v844 = vld [vmem:[#allocation12 + $0x38] sm:$0xf]
    %v845 = vld [vmem:[#allocation12 + $0x3c] sm:$0xf]
    %v846 = vld [vmem:[#allocation13] sm:$0x1]
    %v848 = vlaneseq
    %v849 = vshrl.u32 %v848, 7
    %v850 = vsub.s32 0, %v849
    %v851 = vrot.slane %v846, %v850
    %v869 = vunpack.c.l.b16 %v830
    %v870 = vunpack.c.l.b16 %v831
    %v871 = vunpack.c.l.b16 %v832
    %v872 = vunpack.c.l.b16 %v833
    %v873 = vunpack.c.l.b16 %v834
    %v874 = vunpack.c.l.b16 %v835
    %v875 = vunpack.c.l.b16 %v836
    %v876 = vunpack.c.l.b16 %v837
    %v877 = vunpack.c.l.b16 %v838
    %v878 = vunpack.c.l.b16 %v839
    %v879 = vunpack.c.l.b16 %v840
    %v880 = vunpack.c.l.b16 %v841
    %v881 = vunpack.c.l.b16 %v842
    %v882 = vunpack.c.l.b16 %v843
    %v883 = vunpack.c.l.b16 %v844
    %v884 = vunpack.c.l.b16 %v845
    %v885 = vpack.c.b16 %v870, %v869
    %v886 = vpack.c.b16 %v872, %v871
    %v887 = vpack.c.b16 %v874, %v873
    %v888 = vpack.c.b16 %v876, %v875
    %v889 = vpack.c.b16 %v878, %v877
    %v890 = vpack.c.b16 %v880, %v879
    %v891 = vpack.c.b16 %v882, %v881
    %v892 = vpack.c.b16 %v884, %v883
    %901 = vmatprep.subr.bf16.mxu0 0
    %902 = vmatpush1.bf16.msra.mxu0 %v892
    %903 = vmatprep.subr.bf16.mxu0 0
    %904 = vmatpush1.bf16.msra.mxu0 %v891
    %905 = vmatprep.subr.bf16.mxu0 0
    %906 = vmatpush1.bf16.msra.mxu0 %v890
    %907 = vmatprep.subr.bf16.mxu0 0
    %908 = vmatpush1.bf16.msra.mxu0 %v889
    %909 = vmatprep.subr.bf16.mxu0 0
    %910 = vmatpush1.bf16.msra.mxu0 %v888
    %911 = vmatprep.subr.bf16.mxu0 0
    %912 = vmatpush1.bf16.msra.mxu0 %v887
    %913 = vmatprep.subr.bf16.mxu0 0
    %914 = vmatpush1.bf16.msra.mxu0 %v886
    %915 = vmatprep.subr.bf16.mxu0 0
    %916 = vmatpush1.bf16.msra.mxu0 %v885
    %917 = vmatprep.subr.bf16.mxu0 0
    %918 = vmatpush2.bf16.msra.mxu0 0
    %919 = vmatprep.subr.bf16.mxu0 0
    %920 = vmatpush2.bf16.msra.mxu0 0
    %921 = vmatprep.subr.bf16.mxu0 0
    %922 = vmatpush2.bf16.msra.mxu0 0
    %923 = vmatprep.subr.bf16.mxu0 0
    %924 = vmatpush2.bf16.msra.mxu0 0
    %925 = vmatprep.subr.bf16.mxu0 0
    %926 = vmatpush2.bf16.msra.mxu0 0
    %927 = vmatprep.subr.bf16.mxu0 0
    %928 = vmatpush2.bf16.msra.mxu0 0
    %929 = vmatprep.subr.bf16.mxu0 0
    %930 = vmatpush2.bf16.msra.mxu0 0
    %931 = vmatprep.subr.bf16.mxu0 0
    %932 = vmatpush2.bf16.msra.mxu0 0
    %933 = vmatprep.mubr.bf16.mxu0 0
    %934 = vmatmul.mubr.bf16.gmra.mxu0 %v829
    %v935 = vpop.f32.mrf.mxu0
    %v936 = vadd.f32 %v851, %v935
    %v937 = vpop.f32.mrf.mxu0
    %v938 = vpop.f32.mrf.mxu0
    %v939 = vpop.f32.mrf.mxu0
    %940 = vdwg.mxu0
    %v941 = vmax.f32 %v936, 0.0
    %v942 = vpack.c.bf16 %v941, %v941
    %v943 = vld [vmem:[#allocation15] sm:$0xf]
    %v944 = vld [vmem:[#allocation15 + $0x4] sm:$0xf]
    %v945 = vld [vmem:[#allocation15 + $0x8] sm:$0xf]
    %v946 = vld [vmem:[#allocation15 + $0xc] sm:$0xf]
    %v947 = vld [vmem:[#allocation15 + $0x10] sm:$0xf]
    %v948 = vld [vmem:[#allocation15 + $0x14] sm:$0xf]
    %v949 = vld [vmem:[#allocation15 + $0x18] sm:$0xf]
    %v950 = vld [vmem:[#allocation15 + $0x1c] sm:$0xf]
    %v951 = vld [vmem:[#allocation15 + $0x20] sm:$0xf]
    %v952 = vld [vmem:[#allocation15 + $0x24] sm:$0xf]
    %v953 = vld [vmem:[#allocation15 + $0x28] sm:$0xf]
    %v954 = vld [vmem:[#allocation15 + $0x2c] sm:$0xf]
    %v955 = vld [vmem:[#allocation15 + $0x30] sm:$0xf]
    %v956 = vld [vmem:[#allocation15 + $0x34] sm:$0xf]
    %v957 = vld [vmem:[#allocation15 + $0x38] sm:$0xf]
    %v958 = vld [vmem:[#allocation15 + $0x3c] sm:$0xf]
    %v959 = vld [vmem:[#allocation16] sm:$0x1]
    %v961 = vlaneseq
    %v962 = vshrl.u32 %v961, 7
    %v963 = vsub.s32 0, %v962
    %v964 = vrot.slane %v959, %v963
    %v982 = vunpack.c.l.b16 %v943
    %v983 = vunpack.c.l.b16 %v944
    %v984 = vunpack.c.l.b16 %v945
    %v985 = vunpack.c.l.b16 %v946
    %v986 = vunpack.c.l.b16 %v947
    %v987 = vunpack.c.l.b16 %v948
    %v988 = vunpack.c.l.b16 %v949
    %v989 = vunpack.c.l.b16 %v950
    %v990 = vunpack.c.l.b16 %v951
    %v991 = vunpack.c.l.b16 %v952
    %v992 = vunpack.c.l.b16 %v953
    %v993 = vunpack.c.l.b16 %v954
    %v994 = vunpack.c.l.b16 %v955
    %v995 = vunpack.c.l.b16 %v956
    %v996 = vunpack.c.l.b16 %v957
    %v997 = vunpack.c.l.b16 %v958
    %v998 = vpack.c.b16 %v983, %v982
    %v999 = vpack.c.b16 %v985, %v984
    %v1000 = vpack.c.b16 %v987, %v986
    %v1001 = vpack.c.b16 %v989, %v988
    %v1002 = vpack.c.b16 %v991, %v990
    %v1003 = vpack.c.b16 %v993, %v992
    %v1004 = vpack.c.b16 %v995, %v994
    %v1005 = vpack.c.b16 %v997, %v996
    %1014 = vmatprep.subr.bf16.mxu0 0
    %1015 = vmatpush1.bf16.msra.mxu0 %v1005
    %1016 = vmatprep.subr.bf16.mxu0 0
    %1017 = vmatpush1.bf16.msra.mxu0 %v1004
    %1018 = vmatprep.subr.bf16.mxu0 0
    %1019 = vmatpush1.bf16.msra.mxu0 %v1003
    %1020 = vmatprep.subr.bf16.mxu0 0
    %1021 = vmatpush1.bf16.msra.mxu0 %v1002
    %1022 = vmatprep.subr.bf16.mxu0 0
    %1023 = vmatpush1.bf16.msra.mxu0 %v1001
    %1024 = vmatprep.subr.bf16.mxu0 0
    %1025 = vmatpush1.bf16.msra.mxu0 %v1000
    %1026 = vmatprep.subr.bf16.mxu0 0
    %1027 = vmatpush1.bf16.msra.mxu0 %v999
    %1028 = vmatprep.subr.bf16.mxu0 0
    %1029 = vmatpush1.bf16.msra.mxu0 %v998
    %1030 = vmatprep.subr.bf16.mxu0 0
    %1031 = vmatpush2.bf16.msra.mxu0 0
    %1032 = vmatprep.subr.bf16.mxu0 0
    %1033 = vmatpush2.bf16.msra.mxu0 0
    %1034 = vmatprep.subr.bf16.mxu0 0
    %1035 = vmatpush2.bf16.msra.mxu0 0
    %1036 = vmatprep.subr.bf16.mxu0 0
    %1037 = vmatpush2.bf16.msra.mxu0 0
    %1038 = vmatprep.subr.bf16.mxu0 0
    %1039 = vmatpush2.bf16.msra.mxu0 0
    %1040 = vmatprep.subr.bf16.mxu0 0
    %1041 = vmatpush2.bf16.msra.mxu0 0
    %1042 = vmatprep.subr.bf16.mxu0 0
    %1043 = vmatpush2.bf16.msra.mxu0 0
    %1044 = vmatprep.subr.bf16.mxu0 0
    %1045 = vmatpush2.bf16.msra.mxu0 0
    %1046 = vmatprep.mubr.bf16.mxu0 0
    %1047 = vmatmul.mubr.bf16.gmra.mxu0 %v942
    %v1048 = vpop.f32.mrf.mxu0
    %v1049 = vadd.f32 %v964, %v1048
    %v1050 = vpop.f32.mrf.mxu0
    %v1051 = vpop.f32.mrf.mxu0
    %v1052 = vpop.f32.mrf.mxu0
    %1053 = vdwg.mxu0
    %v1054 = vpack.c.bf16 %v1049, %v1049
    %1055 = vst [vmem:[#allocation18] sm:$0xf] %v1054
    // Predicated region
    $region78: #{tpu_custom_call.1} parent=1 // pred_check
      _
    $region79: #{tpu_custom_call.1} parent=1 // pred_check_branch
      %1057 = sbr.rel (0) target = $region81
    $region80: #{tpu_custom_call.1} parent=1 // pred_region
      %s1059 = ssub.s32 64, 64
      %1060 = vsyncadd [#allocation6], %s1059
      %s1062 = sshll.u32 [#allocation18], 4
      %s1063 = int_to_ptr.vmem [resolvable:$true] %s1062
      %1065 = dma.vmem_to_hbm [thread:$0]  %s1063, 64, %s10, [#allocation6]
    $region81: #{tpu_custom_call.1} parent=1 // pred_fallthru
      _
    // Predicated region
    $region82: #{tpu_custom_call.1} parent=1 // pred_check
      _
    $region83: #{tpu_custom_call.1} parent=1 // pred_check_branch
      %1067 = sbr.rel (0) target = $region85
    $region84: #{tpu_custom_call.1} parent=1 // pred_region
      %s1069 = ssub.s32 128, 128
      %1070 = vsyncadd [#allocation20], %s1069
      %s1072 = sshll.u32 [#allocation19], 4
      %s1073 = int_to_ptr.vmem [resolvable:$true] %s1072
      %1075 = dma.vmem_to_hbm [thread:$0]  %s1073, 128, %s11, [#allocation20]
    $region85: #{tpu_custom_call.1} parent=1 // pred_fallthru
      _
    // Predicated region
    $region86: #{tpu_custom_call.1} parent=1 // pred_check
      _
    $region87: #{tpu_custom_call.1} parent=1 // pred_check_branch
      %1077 = sbr.rel (0) target = $region89
    $region88: #{tpu_custom_call.1} parent=1 // pred_region
      %1078 = dma.done [#allocation6], 64
    $region89: #{tpu_custom_call.1} parent=1 // pred_fallthru
      _
    // Predicated region
    $region90: #{tpu_custom_call.1} parent=1 // pred_check
      _
    $region91: #{tpu_custom_call.1} parent=1 // pred_check_branch
      %1080 = sbr.rel (0) target = $region93
    $region92: #{tpu_custom_call.1} parent=1 // pred_region
      %1081 = dma.done [#allocation20], 128
    $region93: #{tpu_custom_call.1} parent=1 // pred_fallthru
      _
    %1082 = vsyncpa [#allocation5], 1
    %1083 = vsyncpa [#allocation8], 1
    %1084 = vsyncpa [#allocation11], 1
    %1085 = vsyncpa [#allocation14], 1
    %1086 = vsyncpa [#allocation17], 1
    %1087 = vsyncpa [#allocation6], 1
    %1088 = vsyncpa [#allocation20], 1

</llo_original>
